<compile_context>
chip_gen: v7x
topology: tpu7x:2x2x1
jax: 0.10.0
libtpu: 0.0.40
codegen_flags: <defaults>
</compile_context>

<pallas_src>
import jax
import jax.numpy as jnp
from jax import lax
from jax.experimental import pallas as pl
from jax.experimental.pallas import tpu as pltpu

LANES = 128
SUBLANES = 8
CHUNK_ROWS = 256                      # (256,128) f32 live chunk = 128 KiB -> no vreg blowup
TARGET_BLOCK_BYTES = 4 * 1024 * 1024  # per-input, per-pipeline-buffer block size
VMEM_LIMIT_BYTES = 32 * 1024 * 1024   # 2 inputs x 2 buffers x 4 MiB = 16 MiB << 32 MiB


def _ceil_div(a, b):
    return -(-a // b)


def _make_mse_kernel(*, row_tile, chunk, chunk_steps, steps, valid_rows, inv_n):
    """Build the kernel for one static tiling configuration."""
    need_mask = steps * row_tile > valid_rows  # grid overshoots the real row count

    def kernel(x_ref, y_ref, o_ref, acc_ref):
        j = pl.program_id(0)

        @pl.when(j == 0)
        def _init():
            acc_ref[...] = jnp.zeros_like(acc_ref)

        def chunk_body(c, carry):
            start = pl.multiple_of(c * chunk, chunk)
            xa = x_ref[pl.ds(start, chunk), :].astype(jnp.float32)
            ya = y_ref[pl.ds(start, chunk), :].astype(jnp.float32)
            d = xa - ya
            if need_mask:
                # Global row index of every element in this chunk; zero the
                # difference BEFORE squaring so OOB garbage cannot reach acc.
                row = (j * row_tile + start
                       + lax.broadcasted_iota(jnp.int32, (chunk, LANES), 0))
                d = jnp.where(row < valid_rows, d, 0.0)
            # (chunk,128)->(chunk//8,8,128) regroups whole vregs; summing the
            # leading axis is pure VPU vreg adds into one (8,128) partial.
            part = (d * d).reshape(chunk // SUBLANES, SUBLANES, LANES).sum(axis=0)
            return carry + part

        tile_sum = lax.fori_loop(
            0, chunk_steps, chunk_body,
            jnp.zeros((SUBLANES, LANES), jnp.float32),
            unroll=chunk_steps <= 4)
        acc_ref[...] += tile_sum

        @pl.when(j == steps - 1)
        def _finalize():
            total = acc_ref[...].sum(axis=0, keepdims=True)  # (1, 128) sublane reduce
            total = total.sum(axis=1, keepdims=True)         # (1, 1) lane reduce
            o_ref[...] = (total * jnp.float32(inv_n)).astype(o_ref.dtype)

    return kernel


def mse_loss(x, y):
    """Pallas equivalent of torch.nn.MSELoss()(input, target) (mean reduction)."""
    assert x.shape == y.shape, "MSELoss requires matching shapes"
    n = x.size
    assert n > 0, "MSELoss of an empty tensor is undefined"

    itemsize = max(jnp.dtype(x.dtype).itemsize, jnp.dtype(y.dtype).itemsize)
    min_itemsize = min(jnp.dtype(x.dtype).itemsize, jnp.dtype(y.dtype).itemsize)
    pack = max(SUBLANES, 32 // min_itemsize)   # packed sublane tile (8 f32 / 16 bf16 / 32 i8)

    xf = x.reshape(-1)
    yf = y.reshape(-1)
    rows_exact = _ceil_div(n, LANES)

    if n % LANES == 0 and rows_exact >= SUBLANES:
        # Zero-copy path: contiguous reshape is free; no pad, no extra HBM traffic.
        rows = rows_exact
        x2 = xf.reshape(rows, LANES)
        y2 = yf.reshape(rows, LANES)
    else:
        # Fallback for non-128-aligned / tiny inputs: one minimal zero-pad
        # (zeros are exact for sum of squares; the mean divides by the TRUE n).
        rows = _ceil_div(rows_exact, pack) * pack
        padded = rows * LANES
        x2 = jnp.pad(xf, (0, padded - n)).reshape(rows, LANES)
        y2 = jnp.pad(yf, (0, padded - n)).reshape(rows, LANES)

    # --- tile sizing (dtype-aware, adapts to problem size) -------------------
    if rows <= CHUNK_ROWS:
        row_tile = (rows // pack) * pack
        if row_tile == 0:
            row_tile = (rows // SUBLANES) * SUBLANES   # rows >= 8 guaranteed above
        chunk = row_tile
    else:
        max_rows = max(CHUNK_ROWS,
                       (TARGET_BLOCK_BYTES // (LANES * itemsize))
                       // CHUNK_ROWS * CHUNK_ROWS)
        row_tile = min(max_rows, (rows // CHUNK_ROWS) * CHUNK_ROWS)
        chunk = CHUNK_ROWS
    steps = _ceil_div(rows, row_tile)
    chunk_steps = row_tile // chunk

    kernel = _make_mse_kernel(row_tile=row_tile, chunk=chunk,
                              chunk_steps=chunk_steps, steps=steps,
                              valid_rows=rows, inv_n=1.0 / float(n))

    out = pl.pallas_call(
        kernel,
        out_shape=jax.ShapeDtypeStruct((1, 1), jnp.float32),
        grid_spec=pltpu.PrefetchScalarGridSpec(
            num_scalar_prefetch=0,
            grid=(steps,),
            in_specs=[
                pl.BlockSpec((row_tile, LANES), lambda j: (j, 0)),
                pl.BlockSpec((row_tile, LANES), lambda j: (j, 0)),
            ],
            out_specs=pl.BlockSpec((1, 1), lambda j: (0, 0)),
            scratch_shapes=[pltpu.VMEM((SUBLANES, LANES), jnp.float32)],
        ),
        compiler_params=pltpu.CompilerParams(
            dimension_semantics=("arbitrary",),
            vmem_limit_bytes=VMEM_LIMIT_BYTES,
        ),
    )(x2, y2)

    result = out[0, 0]
    out_dtype = jnp.promote_types(x.dtype, y.dtype)
    if jnp.issubdtype(out_dtype, jnp.floating):
        result = result.astype(out_dtype)
    return result


if __name__ == "__main__":
    key = jax.random.PRNGKey(0)
    k1, k2 = jax.random.split(key)
    # Small NCHW-like shapes consistent with a regression loss over feature maps.
    x = jax.random.normal(k1, (2, 4, 16, 16), dtype=jnp.float32)
    t = jax.random.normal(k2, (2, 4, 16, 16), dtype=jnp.float32)

    loss = jax.jit(mse_loss)(x, t)
    jax.block_until_ready(loss)

    # Pure-JAX reference check.
    ref = jnp.mean((x - t) ** 2)
    assert jnp.allclose(loss, ref, rtol=1e-6, atol=1e-6), (loss, ref)
    print("KERNEL_OK")
</pallas_src>

<mosaic_0001>
module attributes {stable_mosaic.version = 11 : i64} {
  func.func @kernel(%arg0: i32, %arg1: memref<16x128xf32, #tpu.memory_space<vmem>>, %arg2: memref<16x128xf32, #tpu.memory_space<vmem>>, %arg3: memref<1x1xf32, #tpu.memory_space<vmem>>, %arg4: memref<8x128xf32, #tpu.memory_space<vmem>>) attributes {dimension_semantics = [#tpu.dimension_semantics<arbitrary>], iteration_bounds = array<i64: 1>, scalar_prefetch = 0 : i64, scratch_operands = 1 : i64, tpu.core_type = #tpu.core_type<tc>, window_params = [{transform_indices = @transform_0, window_bounds = array<i64: 16, 128>}, {transform_indices = @transform_1, window_bounds = array<i64: 16, 128>}, {pipeline_mode = #tpu.pipeline_mode<synchronous>, transform_indices = @transform_2, window_bounds = array<i64: 1, 1>}]} {
    %c0_i32 = arith.constant 0 : i32
    %0 = arith.cmpi eq, %arg0, %c0_i32 : i32
    %1 = arith.extui %0 : i1 to i32
    %c0_i32_0 = arith.constant 0 : i32
    %2 = arith.cmpi ne, %1, %c0_i32_0 : i32
    scf.if %2 {
      %cst_10 = arith.constant 0.000000e+00 : f32
      %21 = vector.broadcast %cst_10 : f32 to vector<8x128xf32>
      %c0_11 = arith.constant 0 : index
      %c0_12 = arith.constant 0 : index
      %22 = vector.load %arg4[%c0_11, %c0_12] : memref<8x128xf32, #tpu.memory_space<vmem>>, vector<8x128xf32>
      tpu.vector_store %arg4[%c0_11, %c0_12], %21 {strides = array<i32>} : memref<8x128xf32, #tpu.memory_space<vmem>>, vector<8x128xf32>,
    } else {
    }
    %cst = arith.constant 0.000000e+00 : f32
    %3 = vector.broadcast %cst : f32 to vector<8x128xf32>
    %c0_i32_1 = arith.constant 0 : i32
    %c16_i32 = arith.constant 16 : i32
    %4 = arith.muli %c0_i32_1, %c16_i32 : i32
    %5 = tpu.assume_multiple %4, 16 : i32
    %6 = arith.index_cast %5 : i32 to index
    %c0 = arith.constant 0 : index
    %7 = vector.load %arg1[%6, %c0] : memref<16x128xf32, #tpu.memory_space<vmem>>, vector<16x128xf32>
    %8 = arith.index_cast %5 : i32 to index
    %c0_2 = arith.constant 0 : index
    %9 = vector.load %arg2[%8, %c0_2] : memref<16x128xf32, #tpu.memory_space<vmem>>, vector<16x128xf32>
    %10 = arith.subf %7, %9 : vector<16x128xf32>
    %11 = arith.mulf %10, %10 : vector<16x128xf32>
    %12 = vector.shape_cast %11 : vector<16x128xf32> to vector<2x8x128xf32>
    %cst_3 = arith.constant dense<0.000000e+00> : vector<8x128xf32>
    %13 = vector.multi_reduction <add>, %12, %cst_3 [0] : vector<2x8x128xf32> to vector<8x128xf32>
    %14 = arith.addf %3, %13 : vector<8x128xf32>
    %c1_i32 = arith.constant 1 : i32
    %c0_4 = arith.constant 0 : index
    %c0_5 = arith.constant 0 : index
    %15 = vector.load %arg4[%c0_4, %c0_5] : memref<8x128xf32, #tpu.memory_space<vmem>>, vector<8x128xf32>
    %16 = arith.addf %15, %14 : vector<8x128xf32>
    %c0_6 = arith.constant 0 : index
    %c0_7 = arith.constant 0 : index
    %17 = vector.load %arg4[%c0_6, %c0_7] : memref<8x128xf32, #tpu.memory_space<vmem>>, vector<8x128xf32>
    tpu.vector_store %arg4[%c0_6, %c0_7], %16 {strides = array<i32>} : memref<8x128xf32, #tpu.memory_space<vmem>>, vector<8x128xf32>,
    %c0_i32_8 = arith.constant 0 : i32
    %18 = arith.cmpi eq, %arg0, %c0_i32_8 : i32
    %19 = arith.extui %18 : i1 to i32
    %c0_i32_9 = arith.constant 0 : i32
    %20 = arith.cmpi ne, %19, %c0_i32_9 : i32
    scf.if %20 {
      %c0_10 = arith.constant 0 : index
      %c0_11 = arith.constant 0 : index
      %21 = vector.load %arg4[%c0_10, %c0_11] : memref<8x128xf32, #tpu.memory_space<vmem>>, vector<8x128xf32>
      %cst_12 = arith.constant dense<0.000000e+00> : vector<128xf32>
      %22 = vector.multi_reduction <add>, %21, %cst_12 [0] : vector<8x128xf32> to vector<128xf32>
      %23 = vector.shape_cast %22 : vector<128xf32> to vector<1x128xf32>
      %cst_13 = arith.constant dense<0.000000e+00> : vector<1xf32>
      %24 = vector.multi_reduction <add>, %23, %cst_13 [1] : vector<1x128xf32> to vector<1xf32>
      %25 = vector.shape_cast %24 : vector<1xf32> to vector<1x1xf32>
      %cst_14 = arith.constant 4.8828125E-4 : f32
      %26 = vector.broadcast %cst_14 : f32 to vector<1x1xf32>
      %27 = arith.mulf %25, %26 : vector<1x1xf32>
      %c0_15 = arith.constant 0 : index
      %c0_16 = arith.constant 0 : index
      %28 = vector.load %arg3[%c0_15, %c0_16] : memref<1x1xf32, #tpu.memory_space<vmem>>, vector<1x1xf32>
      tpu.vector_store %arg3[%c0_15, %c0_16], %27 {strides = array<i32>} : memref<1x1xf32, #tpu.memory_space<vmem>>, vector<1x1xf32>,
    } else {
    }
    return
  }
  func.func @transform_0(%arg0: i32) -> (i32, i32) {
    %c0_i32 = arith.constant 0 : i32
    %c0_i32_0 = arith.constant 0 : i32
    return %arg0, %c0_i32 : i32, i32
  }
  func.func @transform_1(%arg0: i32) -> (i32, i32) {
    %c0_i32 = arith.constant 0 : i32
    %c0_i32_0 = arith.constant 0 : i32
    return %arg0, %c0_i32 : i32, i32
  }
  func.func @transform_2(%arg0: i32) -> (i32, i32) {
    %c0_i32 = arith.constant 0 : i32
    %c0_i32_0 = arith.constant 0 : i32
    %c0_i32_1 = arith.constant 0 : i32
    return %c0_i32, %c0_i32_0 : i32, i32
  }
}

</mosaic_0001>

<llo_original>
// kernel: mse_loss.1
$region0: #{mse_loss.1}
  #allocation0 [shape = 'u32[]', space=smem, size = 0x4, offset = 0x4, fixed_abs, tag = 'smem constant byte address 0x4 - core index']
  #allocation1 [shape = 'u32[144,128]{1,0:T(1,128)}', space=vmem, size = 0x12000, scoped, tag = 'internal scratch']
  #allocation2 [shape = 'f32[8,128]{1,0:T(8,128)}', space=vmem, size = 0x1000, scoped, tag = 'scratch operand']
  %s0 = inlined_call_operand.vmem [shape: f32[16,128], index: 0, kind: input, shape index: {}]
  %s1 = inlined_call_operand.vmem [shape: f32[16,128], index: 1, kind: input, shape index: {}]
  %s2 = inlined_call_operand.hbm [shape: f32[1,1], index: 2, kind: output, shape index: {}]
  %s3 = sld [smem:[#allocation0]]
  $region26: #{mse_loss.1} parent=0
    _
  %s5 = ssub.s32 1, %s3
  %s6 = scalar_select 0, %s5, %s3
  $region1: #{mse_loss.1} parent=0
    #allocation3 [shape = 'u8[512]{0}', space=vmem, size = 0x400, scoped, tag = 'output window, operand 0, single buffered']
    #allocation4 [shape = 's32[1]{0}', space=sflag, size = 0x4, scoped, tag = 'scoped memory for mse_loss.1']
    %7 = vsyncpa [#allocation4], 0
    // Predicated region
    $region2: #{mse_loss.1} parent=1 // pred_check
      _
    $region3: #{mse_loss.1} parent=1 // pred_check_branch
      %9 = sbr.rel (0) target = $region5
    $region4: #{mse_loss.1} parent=1 // pred_region
      _
    $region5: #{mse_loss.1} parent=1 // pred_fallthru
      _
    // Predicated region
    $region6: #{mse_loss.1} parent=1 // pred_check
      _
    $region7: #{mse_loss.1} parent=1 // pred_check_branch
      %11 = sbr.rel (0) target = $region9
    $region8: #{mse_loss.1} parent=1 // pred_region
      _
    $region9: #{mse_loss.1} parent=1 // pred_fallthru
      _
    %p12 = scmp.eq.s32.totalorder 0, 0
    // Predicated region
    $region10: #{mse_loss.1} parent=1 // pred_check
      %p13 = pneg %p12
    $region11: #{mse_loss.1} parent=1 // pred_check_branch
      %15 = sbr.rel (%p13) target = $region13
    $region12: #{mse_loss.1} parent=1 // pred_region
      %16 = vst [vmem:[#allocation2] sm:$0xff] 0.0
    $region13: #{mse_loss.1} parent=1 // pred_fallthru
      _
    %v17 = vld [vmem:[%s0] sm:$0xff]
    %v18 = vld [vmem:[%s0 + $0x8] sm:$0xff]
    %v19 = vld [vmem:[%s1] sm:$0xff]
    %v20 = vld [vmem:[%s1 + $0x8] sm:$0xff]
    %v21 = vsub.f32 %v17, %v19
    %v22 = vsub.f32 %v18, %v20
    %v23 = vmul.f32 %v21, %v21
    %v24 = vmul.f32 %v22, %v22
    %v25 = vadd.f32 %v23, %v24
    %v26 = vadd.f32 %v25, 0.0
    %v27 = vld [vmem:[#allocation2] sm:$0xff]
    %v28 = vadd.f32 %v27, %v26
    %29 = vst [vmem:[#allocation2] sm:$0xff] %v28
    // Predicated region
    $region14: #{mse_loss.1} parent=1 // pred_check
      %p30 = pneg %p12
    $region15: #{mse_loss.1} parent=1 // pred_check_branch
      %32 = sbr.rel (%p30) target = $region17
    $region16: #{mse_loss.1} parent=1 // pred_region
      %v33 = vld [vmem:[#allocation2] sm:$0xff]
      %v34 = vrot.slane %v33, 4
      %v35 = vadd.f32 %v33, %v34
      %v36 = vrot.slane %v35, 2
      %v37 = vadd.f32 %v35, %v36
      %v38 = vrot.slane %v37, 1
      %v39 = vadd.f32 %v37, %v38
      %40 = vadd.xlane.f32.xlu0 %v39
      %v41 = vpop.xlane.xlu0 %40
      %v42 = vmul.f32 %v41, 0.00048828125
      %vm43 = vcmask 0
      %44 = vst.msk [vmem:[#allocation3] sm:$0x1] %vm43, %v42
    $region17: #{mse_loss.1} parent=1 // pred_fallthru
      _
    // Predicated region
    $region18: #{mse_loss.1} parent=1 // pred_check
      _
    $region19: #{mse_loss.1} parent=1 // pred_check_branch
      %46 = sbr.rel (0) target = $region21
    $region20: #{mse_loss.1} parent=1 // pred_region
      %s48 = ssub.s32 16, 16
      %49 = vsyncadd [#allocation4], %s48
      %s51 = sshll.u32 [#allocation3], 4
      %s52 = int_to_ptr.vmem [resolvable:$true] %s51
      %54 = dma.vmem_to_hbm [thread:$0]  %s52, 16, %s2, [#allocation4]
    $region21: #{mse_loss.1} parent=1 // pred_fallthru
      _
    // Predicated region
    $region22: #{mse_loss.1} parent=1 // pred_check
      _
    $region23: #{mse_loss.1} parent=1 // pred_check_branch
      %56 = sbr.rel (0) target = $region25
    $region24: #{mse_loss.1} parent=1 // pred_region
      %57 = dma.done [#allocation4], 16
    $region25: #{mse_loss.1} parent=1 // pred_fallthru
      _
    %58 = vsyncpa [#allocation4], 1

</llo_original>
